<compile_context>
chip_gen: v7x
topology: tpu7x:2x2x1
jax: 0.10.0
libtpu: 0.0.40
codegen_flags: <defaults>
</compile_context>

<pallas_src>
import jax
import jax.numpy as jnp
from jax.experimental import pallas as pl
from jax.experimental.pallas import tpu as pltpu


def _round_up(x, m):
    return ((x + m - 1) // m) * m


def _encoder_kernel(x_ref, w1_ref, b1_ref, w2_ref, b2_ref, out_ref):
    # x_ref : (TILE_N, D)      f32 (or bf16) — cast to bf16 here, on the VPU
    # w1_ref: (D, H)           bf16      b1_ref: (1, H)      f32
    # w2_ref: (H, F_pad)       bf16      b2_ref: (1, F_pad)  f32
    # out_ref: (TILE_N, F_pad) bf16
    x = x_ref[...].astype(jnp.bfloat16)
    # First matmul on the MXU with f32 accumulation; bias + ReLU in f32 on VPU.
    h = jnp.dot(x, w1_ref[...], preferred_element_type=jnp.float32) + b1_ref[...]
    h = jnp.maximum(h, 0.0)
    # Second matmul: feed the MXU in bf16, accumulate in f32.
    y = jnp.dot(h.astype(jnp.bfloat16), w2_ref[...],
                preferred_element_type=jnp.float32) + b2_ref[...]
    out_ref[...] = y.astype(out_ref.dtype)


def encoder_forward(x_nchw, w1, b1, w2, b2, *, tile_n=1024, out_dtype=jnp.bfloat16):
    """Forward pass of EncoderWithKNN (== encoder(x)). Returns (N, 64) features."""
    n = x_nchw.shape[0]
    d = x_nchw.shape[1] * x_nchw.shape[2] * x_nchw.shape[3]
    hidden = w1.shape[1]
    feat = w2.shape[1]

    # Flatten only — metadata op, no cast, no pad. x makes exactly one HBM trip.
    x_flat = x_nchw.reshape(n, d)

    # Batch tile: multiple of 16 (bf16 output sublane packing).
    #  * capped at tile_n,
    #  * capped so the grid has >= 2 steps when possible (v7x dual-TC),
    #  * capped so a double-buffered x tile stays comfortably inside VMEM.
    tn = min(tile_n, _round_up(pl.cdiv(n, 2), 16))
    x_bytes = jnp.dtype(x_flat.dtype).itemsize
    vmem_cap_rows = max(16, ((8 * 1024 * 1024) // max(d * x_bytes, 1)) // 16 * 16)
    tn = max(16, min(tn, vmem_cap_rows))
    grid = (pl.cdiv(n, tn),)  # ragged last block; OOB rows are masked, never written

    # Lane-dense output: pad feature dim up to a multiple of 128 (unmasked vst).
    feat_pad = _round_up(feat, 128)
    w1_bf = w1.astype(jnp.bfloat16)
    w2_bf = jnp.pad(w2, ((0, 0), (0, feat_pad - feat))).astype(jnp.bfloat16)
    b1_2d = b1.reshape(1, hidden).astype(jnp.float32)
    b2_2d = jnp.pad(b2.reshape(1, feat), ((0, 0), (0, feat_pad - feat))).astype(jnp.float32)

    out_bytes = jnp.dtype(out_dtype).itemsize
    bytes_accessed = (
        x_flat.size * x_bytes + w1_bf.size * 2 + w2_bf.size * 2
        + b1_2d.size * 4 + b2_2d.size * 4 + n * feat_pad * out_bytes
    )
    cost = pl.CostEstimate(
        flops=2 * n * d * hidden + 2 * n * hidden * feat_pad,
        transcendentals=0,
        bytes_accessed=bytes_accessed,
    )

    out_padded = pl.pallas_call(
        _encoder_kernel,
        out_shape=jax.ShapeDtypeStruct((n, feat_pad), out_dtype),
        grid_spec=pltpu.PrefetchScalarGridSpec(
            num_scalar_prefetch=0,
            grid=grid,
            in_specs=[
                pl.BlockSpec((tn, d), lambda i: (i, 0)),             # x tile (pipelined)
                pl.BlockSpec((d, hidden), lambda i: (0, 0)),         # w1 resident
                pl.BlockSpec((1, hidden), lambda i: (0, 0)),         # b1 resident
                pl.BlockSpec((hidden, feat_pad), lambda i: (0, 0)),  # w2 resident
                pl.BlockSpec((1, feat_pad), lambda i: (0, 0)),       # b2 resident
            ],
            out_specs=pl.BlockSpec((tn, feat_pad), lambda i: (i, 0)),
        ),
        compiler_params=pltpu.CompilerParams(
            dimension_semantics=("parallel",),   # shard batch tiles across TCs on v7x
            vmem_limit_bytes=32 << 20,           # kernel needs < 10 MiB; leave headroom
        ),
        cost_estimate=cost,
    )(x_flat, w1_bf, b1_2d, w2_bf, b2_2d)

    # Strip the lane-padding of the feature dim (batch dim is already exact).
    return out_padded[:, :feat]


class EncoderWithKNNPallas:
    """JAX/Pallas analogue of EncoderWithKNN. forward == encoder only."""

    HIDDEN = 128
    FEATURE_DIM = 64  # matches KNN(input_dim=64, ...)

    def __init__(self, in_dim, num_classes=10, k=3, seed=0):
        del num_classes, k  # KNN head is fit/predict-only; not part of forward
        key = jax.random.PRNGKey(seed)
        k1, k2, k3, k4 = jax.random.split(key, 4)
        s1 = (1.0 / in_dim) ** 0.5
        s2 = (1.0 / self.HIDDEN) ** 0.5
        self.w1 = jax.random.uniform(k1, (in_dim, self.HIDDEN), jnp.float32, -s1, s1)
        self.b1 = jax.random.uniform(k2, (self.HIDDEN,), jnp.float32, -s1, s1)
        self.w2 = jax.random.uniform(k3, (self.HIDDEN, self.FEATURE_DIM), jnp.float32, -s2, s2)
        self.b2 = jax.random.uniform(k4, (self.FEATURE_DIM,), jnp.float32, -s2, s2)

    def forward(self, x_nchw):
        # bf16 features (KNN distance quality is unaffected at this precision);
        # pass out_dtype=jnp.float32 if exact f32 features are required.
        return encoder_forward(x_nchw, self.w1, self.b1, self.w2, self.b2)

    # TODO(synk): fit_knn / predict_knn wrap sklearn KNeighborsClassifier
    # (non-tensor, CPU-side); no Pallas equivalent, intentionally omitted.


if __name__ == "__main__":
    # Small deterministic example input: batch=2, channels=4, spatial=16x16 (NCHW).
    N, C, H, W = 2, 4, 16, 16
    key = jax.random.PRNGKey(0)
    x = jax.random.normal(key, (N, C, H, W), dtype=jnp.float32)

    model = EncoderWithKNNPallas(in_dim=C * H * W, num_classes=10, k=3, seed=0)
    out = model.forward(x)
    out = jax.block_until_ready(out)

    # Sanity check against plain-JAX f32 reference (loose tolerance: bf16 path).
    x_flat = x.reshape(N, -1)
    ref = jnp.maximum(x_flat @ model.w1 + model.b1, 0.0) @ model.w2 + model.b2
    assert out.shape == (N, 64)
    assert jnp.allclose(out.astype(jnp.float32), ref, atol=5e-2, rtol=5e-2), (
        float(jnp.max(jnp.abs(out.astype(jnp.float32) - ref))))

    print("KERNEL_OK")
</pallas_src>

<mosaic_0001>
module attributes {stable_mosaic.version = 11 : i64} {
  func.func @_encoder_kernel(%arg0: i32, %arg1: memref<16x1024xf32, #tpu.memory_space<vmem>>, %arg2: memref<1024x128xbf16, #tpu.memory_space<vmem>>, %arg3: memref<1x128xf32, #tpu.memory_space<vmem>>, %arg4: memref<128x128xbf16, #tpu.memory_space<vmem>>, %arg5: memref<1x128xf32, #tpu.memory_space<vmem>>, %arg6: memref<16x128xbf16, #tpu.memory_space<vmem>>) attributes {dimension_semantics = [#tpu.dimension_semantics<parallel>], iteration_bounds = array<i64: 1>, scalar_prefetch = 0 : i64, scratch_operands = 0 : i64, tpu.core_type = #tpu.core_type<tc>, window_params = [{transform_indices = @transform_0, window_bounds = array<i64: 16, 1024>}, {pipeline_mode = #tpu.pipeline_mode<synchronous>, transform_indices = @transform_1, window_bounds = array<i64: 1024, 128>}, {pipeline_mode = #tpu.pipeline_mode<synchronous>, transform_indices = @transform_2, window_bounds = array<i64: 1, 128>}, {pipeline_mode = #tpu.pipeline_mode<synchronous>, transform_indices = @transform_3, window_bounds = array<i64: 128, 128>}, {pipeline_mode = #tpu.pipeline_mode<synchronous>, transform_indices = @transform_4, window_bounds = array<i64: 1, 128>}, {transform_indices = @transform_5, window_bounds = array<i64: 16, 128>}]} {
    %c0 = arith.constant 0 : index
    %c0_0 = arith.constant 0 : index
    %0 = vector.load %arg1[%c0, %c0_0] : memref<16x1024xf32, #tpu.memory_space<vmem>>, vector<16x1024xf32>
    %1 = arith.truncf %0 : vector<16x1024xf32> to vector<16x1024xbf16>
    %c0_1 = arith.constant 0 : index
    %c0_2 = arith.constant 0 : index
    %2 = vector.load %arg2[%c0_1, %c0_2] : memref<1024x128xbf16, #tpu.memory_space<vmem>>, vector<1024x128xbf16>
    %cst = arith.constant dense<0.000000e+00> : vector<16x128xf32>
    %3 = tpu.matmul %1, %2, %cst {dimension_numbers = #tpu.dot_dimension_numbers<[1], [0], [0], [1], [0, 0, 1, 1], [], []>} : vector<16x1024xbf16>, vector<1024x128xbf16>, vector<16x128xf32> -> vector<16x128xf32>
    %c0_3 = arith.constant 0 : index
    %c0_4 = arith.constant 0 : index
    %4 = vector.load %arg3[%c0_3, %c0_4] : memref<1x128xf32, #tpu.memory_space<vmem>>, vector<1x128xf32>
    %5 = vector.broadcast %4 : vector<1x128xf32> to vector<16x128xf32>
    %6 = arith.addf %3, %5 : vector<16x128xf32>
    %cst_5 = arith.constant 0.000000e+00 : f32
    %7 = vector.broadcast %cst_5 : f32 to vector<16x128xf32>
    %8 = arith.maximumf %6, %7 : vector<16x128xf32>
    %9 = arith.truncf %8 : vector<16x128xf32> to vector<16x128xbf16>
    %c0_6 = arith.constant 0 : index
    %c0_7 = arith.constant 0 : index
    %10 = vector.load %arg4[%c0_6, %c0_7] : memref<128x128xbf16, #tpu.memory_space<vmem>>, vector<128x128xbf16>
    %cst_8 = arith.constant dense<0.000000e+00> : vector<16x128xf32>
    %11 = tpu.matmul %9, %10, %cst_8 {dimension_numbers = #tpu.dot_dimension_numbers<[1], [0], [0], [1], [0, 0, 1, 1], [], []>} : vector<16x128xbf16>, vector<128x128xbf16>, vector<16x128xf32> -> vector<16x128xf32>
    %c0_9 = arith.constant 0 : index
    %c0_10 = arith.constant 0 : index
    %12 = vector.load %arg5[%c0_9, %c0_10] : memref<1x128xf32, #tpu.memory_space<vmem>>, vector<1x128xf32>
    %13 = vector.broadcast %12 : vector<1x128xf32> to vector<16x128xf32>
    %14 = arith.addf %11, %13 : vector<16x128xf32>
    %15 = arith.truncf %14 : vector<16x128xf32> to vector<16x128xbf16>
    %c0_11 = arith.constant 0 : index
    %c0_12 = arith.constant 0 : index
    %16 = vector.load %arg6[%c0_11, %c0_12] : memref<16x128xbf16, #tpu.memory_space<vmem>>, vector<16x128xbf16>
    tpu.vector_store %arg6[%c0_11, %c0_12], %15 {strides = array<i32>} : memref<16x128xbf16, #tpu.memory_space<vmem>>, vector<16x128xbf16>,
    return
  }
  func.func @transform_0(%arg0: i32) -> (i32, i32) {
    %c0_i32 = arith.constant 0 : i32
    %c0_i32_0 = arith.constant 0 : i32
    return %arg0, %c0_i32 : i32, i32
  }
  func.func @transform_1(%arg0: i32) -> (i32, i32) {
    %c0_i32 = arith.constant 0 : i32
    %c0_i32_0 = arith.constant 0 : i32
    %c0_i32_1 = arith.constant 0 : i32
    return %c0_i32, %c0_i32_0 : i32, i32
  }
  func.func @transform_2(%arg0: i32) -> (i32, i32) {
    %c0_i32 = arith.constant 0 : i32
    %c0_i32_0 = arith.constant 0 : i32
    %c0_i32_1 = arith.constant 0 : i32
    return %c0_i32, %c0_i32_0 : i32, i32
  }
  func.func @transform_3(%arg0: i32) -> (i32, i32) {
    %c0_i32 = arith.constant 0 : i32
    %c0_i32_0 = arith.constant 0 : i32
    %c0_i32_1 = arith.constant 0 : i32
    return %c0_i32, %c0_i32_0 : i32, i32
  }
  func.func @transform_4(%arg0: i32) -> (i32, i32) {
    %c0_i32 = arith.constant 0 : i32
    %c0_i32_0 = arith.constant 0 : i32
    %c0_i32_1 = arith.constant 0 : i32
    return %c0_i32, %c0_i32_0 : i32, i32
  }
  func.func @transform_5(%arg0: i32) -> (i32, i32) {
    %c0_i32 = arith.constant 0 : i32
    %c0_i32_0 = arith.constant 0 : i32
    return %arg0, %c0_i32 : i32, i32
  }
}

</mosaic_0001>

<llo_original>
// kernel: tpu_custom_call.1
$region0: #{tpu_custom_call.1}
  #allocation0 [shape = 'u32[]', space=smem, size = 0x4, offset = 0x4, fixed_abs, tag = 'smem constant byte address 0x4 - core index']
  #allocation1 [shape = 'u32[144,128]{1,0:T(1,128)}', space=vmem, size = 0x12000, scoped, tag = 'internal scratch']
  %s0 = inlined_call_operand.hbm [shape: f32[2,1024], index: 0, kind: input, shape index: {}]
  %s1 = inlined_call_operand.hbm [shape: bf16[1024,128], index: 1, kind: input, shape index: {}]
  %s2 = inlined_call_operand.vmem [shape: f32[1,128], index: 2, kind: input, shape index: {}]
  %s3 = inlined_call_operand.hbm [shape: bf16[128,128], index: 3, kind: input, shape index: {}]
  %s4 = inlined_call_operand.vmem [shape: f32[1,128], index: 4, kind: input, shape index: {}]
  %s5 = inlined_call_operand.hbm [shape: bf16[2,128], index: 5, kind: output, shape index: {}]
  %s6 = sld [smem:[#allocation0]]
  $region42: #{tpu_custom_call.1} parent=0
    _
  %s8 = ssub.s32 1, %s6
  %s9 = scalar_select 0, %s8, %s6
  $region1: #{tpu_custom_call.1} parent=0
    #allocation2 [shape = 'u8[65536]{0}', space=vmem, size = 0x10000, scoped, tag = 'input window, operand 0, single buffered']
    #allocation3 [shape = 's32[1]{0}', space=sflag, size = 0x4, scoped, tag = 'scoped memory for tpu_custom_call.1']
    #allocation4 [shape = 's32[1]{0}', space=sflag, size = 0x4, scoped, tag = 'scoped memory for tpu_custom_call.1']
    #allocation5 [shape = 'u8[262144]{0}', space=vmem, size = 0x40000, scoped, tag = 'input window, operand 1, single buffered']
    #allocation6 [shape = 's32[1]{0}', space=sflag, size = 0x4, scoped, tag = 'scoped memory for tpu_custom_call.1']
    #allocation7 [shape = 'u8[32768]{0}', space=vmem, size = 0x8000, scoped, tag = 'input window, operand 3, single buffered']
    #allocation8 [shape = 'u8[4096]{0}', space=vmem, size = 0x1000, scoped, tag = 'output window, operand 0, single buffered']
    %10 = vsyncpa [#allocation3], 0
    %11 = vsyncpa [#allocation6], 0
    %12 = vsyncpa [#allocation4], 0
    // Predicated region
    $region2: #{tpu_custom_call.1} parent=1 // pred_check
      _
    $region3: #{tpu_custom_call.1} parent=1 // pred_check_branch
      %14 = sbr.rel (0) target = $region5
    $region4: #{tpu_custom_call.1} parent=1 // pred_region
      %s16 = ssub.s32 2048, 256
      %17 = vsyncadd [#allocation3], %s16
      %s18 = sshll.u32 [#allocation2], 4
      %s19 = int_to_ptr.vmem [resolvable:$true] %s18
      %24 = dma.hbm_to_vmem [thread:$0]  %s0, 256, %s19, [#allocation3], 256, 256, 16
    $region5: #{tpu_custom_call.1} parent=1 // pred_fallthru
      _
    // Predicated region
    $region6: #{tpu_custom_call.1} parent=1 // pred_check
      _
    $region7: #{tpu_custom_call.1} parent=1 // pred_check_branch
      %26 = sbr.rel (0) target = $region9
    $region8: #{tpu_custom_call.1} parent=1 // pred_region
      %s28 = ssub.s32 8192, 8192
      %29 = vsyncadd [#allocation6], %s28
      %s30 = sshll.u32 [#allocation5], 4
      %s31 = int_to_ptr.vmem [resolvable:$true] %s30
      %36 = dma.hbm_to_vmem [thread:$0]  %s1, 8192, %s31, [#allocation6], 64, 64, 4
    $region9: #{tpu_custom_call.1} parent=1 // pred_fallthru
      _
    // Predicated region
    $region10: #{tpu_custom_call.1} parent=1 // pred_check
      _
    $region11: #{tpu_custom_call.1} parent=1 // pred_check_branch
      %38 = sbr.rel (0) target = $region13
    $region12: #{tpu_custom_call.1} parent=1 // pred_region
      _
    $region13: #{tpu_custom_call.1} parent=1 // pred_fallthru
      _
    // Predicated region
    $region14: #{tpu_custom_call.1} parent=1 // pred_check
      _
    $region15: #{tpu_custom_call.1} parent=1 // pred_check_branch
      %40 = sbr.rel (0) target = $region17
    $region16: #{tpu_custom_call.1} parent=1 // pred_region
      %s42 = ssub.s32 1024, 1024
      %43 = vsyncadd [#allocation6], %s42
      %s44 = sshll.u32 [#allocation7], 4
      %s45 = int_to_ptr.vmem [resolvable:$true] %s44
      %50 = dma.hbm_to_vmem [thread:$0]  %s3, 1024, %s45, [#allocation6], 64, 64, 4
    $region17: #{tpu_custom_call.1} parent=1 // pred_fallthru
      _
    // Predicated region
    $region18: #{tpu_custom_call.1} parent=1 // pred_check
      _
    $region19: #{tpu_custom_call.1} parent=1 // pred_check_branch
      %52 = sbr.rel (0) target = $region21
    $region20: #{tpu_custom_call.1} parent=1 // pred_region
      _
    $region21: #{tpu_custom_call.1} parent=1 // pred_fallthru
      _
    // Predicated region
    $region22: #{tpu_custom_call.1} parent=1 // pred_check
      _
    $region23: #{tpu_custom_call.1} parent=1 // pred_check_branch
      %54 = sbr.rel (0) target = $region25
    $region24: #{tpu_custom_call.1} parent=1 // pred_region
      %55 = dma.done [#allocation3], 2048
    $region25: #{tpu_custom_call.1} parent=1 // pred_fallthru
      _
    // Predicated region
    $region26: #{tpu_custom_call.1} parent=1 // pred_check
      _
    $region27: #{tpu_custom_call.1} parent=1 // pred_check_branch
      %57 = sbr.rel (0) target = $region29
    $region28: #{tpu_custom_call.1} parent=1 // pred_region
      %58 = dma.done [#allocation6], 8192
    $region29: #{tpu_custom_call.1} parent=1 // pred_fallthru
      _
    // Predicated region
    $region30: #{tpu_custom_call.1} parent=1 // pred_check
      _
    $region31: #{tpu_custom_call.1} parent=1 // pred_check_branch
      %60 = sbr.rel (0) target = $region33
    $region32: #{tpu_custom_call.1} parent=1 // pred_region
      %61 = dma.done [#allocation6], 1024
    $region33: #{tpu_custom_call.1} parent=1 // pred_fallthru
      _
    %v63 = vld [vmem:[#allocation2] sm:$0xff]
    %v64 = vld [vmem:[#allocation2 + $0x8] sm:$0xff]
    %v65 = vld [vmem:[#allocation2 + $0x10] sm:$0xff]
    %v66 = vld [vmem:[#allocation2 + $0x18] sm:$0xff]
    %v67 = vld [vmem:[#allocation2 + $0x20] sm:$0xff]
    %v68 = vld [vmem:[#allocation2 + $0x28] sm:$0xff]
    %v69 = vld [vmem:[#allocation2 + $0x30] sm:$0xff]
    %v70 = vld [vmem:[#allocation2 + $0x38] sm:$0xff]
    %v71 = vld [vmem:[#allocation2 + $0x40] sm:$0xff]
    %v72 = vld [vmem:[#allocation2 + $0x48] sm:$0xff]
    %v73 = vld [vmem:[#allocation2 + $0x50] sm:$0xff]
    %v74 = vld [vmem:[#allocation2 + $0x58] sm:$0xff]
    %v75 = vld [vmem:[#allocation2 + $0x60] sm:$0xff]
    %v76 = vld [vmem:[#allocation2 + $0x68] sm:$0xff]
    %v77 = vld [vmem:[#allocation2 + $0x70] sm:$0xff]
    %v78 = vld [vmem:[#allocation2 + $0x78] sm:$0xff]
    %v95 = vcombine.low %v63, %v65
    %v96 = vcombine.high %v63, %v65
    %v97 = vcombine.low %v67, %v69
    %v98 = vcombine.high %v67, %v69
    %v100 = vunpack.c.l.s4 1983009808
    %v101 = vunpack.c.0.s8 %v100
    %v102 = vlaneseq
    %v103 = vshrl.u32 %v102, 7
    %v104 = vsub.s32 %v101, %v103
    %v105 = vrot.slane %v95, %v104
    %v107 = vunpack.c.l.s4 1983009808
    %v108 = vunpack.c.0.s8 %v107
    %v109 = vlaneseq
    %v110 = vshrl.u32 %v109, 7
    %v111 = vsub.s32 %v108, %v110
    %v112 = vrot.slane %v96, %v111
    %v114 = vunpack.c.l.s4 1983009808
    %v115 = vunpack.c.0.s8 %v114
    %v116 = vlaneseq
    %v117 = vshrl.u32 %v116, 7
    %v118 = vsub.s32 %v115, %v117
    %v119 = vrot.slane %v97, %v118
    %v121 = vunpack.c.l.s4 1983009808
    %v122 = vunpack.c.0.s8 %v121
    %v123 = vlaneseq
    %v124 = vshrl.u32 %v123, 7
    %v125 = vsub.s32 %v122, %v124
    %v126 = vrot.slane %v98, %v125
    %v127 = vcombine.low %v105, %v119
    %v128 = vcombine.high %v105, %v119
    %v129 = vcombine.low %v112, %v126
    %v130 = vcombine.high %v112, %v126
    %v131 = vcombine.low %v64, %v66
    %v132 = vcombine.high %v64, %v66
    %v133 = vcombine.low %v68, %v70
    %v134 = vcombine.high %v68, %v70
    %v136 = vunpack.c.l.s4 1983009808
    %v137 = vunpack.c.0.s8 %v136
    %v138 = vlaneseq
    %v139 = vshrl.u32 %v138, 7
    %v140 = vsub.s32 %v137, %v139
    %v141 = vrot.slane %v131, %v140
    %v143 = vunpack.c.l.s4 1983009808
    %v144 = vunpack.c.0.s8 %v143
    %v145 = vlaneseq
    %v146 = vshrl.u32 %v145, 7
    %v147 = vsub.s32 %v144, %v146
    %v148 = vrot.slane %v132, %v147
    %v150 = vunpack.c.l.s4 1983009808
    %v151 = vunpack.c.0.s8 %v150
    %v152 = vlaneseq
    %v153 = vshrl.u32 %v152, 7
    %v154 = vsub.s32 %v151, %v153
    %v155 = vrot.slane %v133, %v154
    %v157 = vunpack.c.l.s4 1983009808
    %v158 = vunpack.c.0.s8 %v157
    %v159 = vlaneseq
    %v160 = vshrl.u32 %v159, 7
    %v161 = vsub.s32 %v158, %v160
    %v162 = vrot.slane %v134, %v161
    %v163 = vcombine.low %v141, %v155
    %v164 = vcombine.high %v141, %v155
    %v165 = vcombine.low %v148, %v162
    %v166 = vcombine.high %v148, %v162
    %v167 = vcombine.low %v71, %v73
    %v168 = vcombine.high %v71, %v73
    %v169 = vcombine.low %v75, %v77
    %v170 = vcombine.high %v75, %v77
    %v172 = vunpack.c.l.s4 1983009808
    %v173 = vunpack.c.0.s8 %v172
    %v174 = vlaneseq
    %v175 = vshrl.u32 %v174, 7
    %v176 = vsub.s32 %v173, %v175
    %v177 = vrot.slane %v167, %v176
    %v179 = vunpack.c.l.s4 1983009808
    %v180 = vunpack.c.0.s8 %v179
    %v181 = vlaneseq
    %v182 = vshrl.u32 %v181, 7
    %v183 = vsub.s32 %v180, %v182
    %v184 = vrot.slane %v168, %v183
    %v186 = vunpack.c.l.s4 1983009808
    %v187 = vunpack.c.0.s8 %v186
    %v188 = vlaneseq
    %v189 = vshrl.u32 %v188, 7
    %v190 = vsub.s32 %v187, %v189
    %v191 = vrot.slane %v169, %v190
    %v193 = vunpack.c.l.s4 1983009808
    %v194 = vunpack.c.0.s8 %v193
    %v195 = vlaneseq
    %v196 = vshrl.u32 %v195, 7
    %v197 = vsub.s32 %v194, %v196
    %v198 = vrot.slane %v170, %v197
    %v199 = vcombine.low %v177, %v191
    %v200 = vcombine.high %v177, %v191
    %v201 = vcombine.low %v184, %v198
    %v202 = vcombine.high %v184, %v198
    %v203 = vcombine.low %v72, %v74
    %v204 = vcombine.high %v72, %v74
    %v205 = vcombine.low %v76, %v78
    %v206 = vcombine.high %v76, %v78
    %v208 = vunpack.c.l.s4 1983009808
    %v209 = vunpack.c.0.s8 %v208
    %v210 = vlaneseq
    %v211 = vshrl.u32 %v210, 7
    %v212 = vsub.s32 %v209, %v211
    %v213 = vrot.slane %v203, %v212
    %v215 = vunpack.c.l.s4 1983009808
    %v216 = vunpack.c.0.s8 %v215
    %v217 = vlaneseq
    %v218 = vshrl.u32 %v217, 7
    %v219 = vsub.s32 %v216, %v218
    %v220 = vrot.slane %v204, %v219
    %v222 = vunpack.c.l.s4 1983009808
    %v223 = vunpack.c.0.s8 %v222
    %v224 = vlaneseq
    %v225 = vshrl.u32 %v224, 7
    %v226 = vsub.s32 %v223, %v225
    %v227 = vrot.slane %v205, %v226
    %v229 = vunpack.c.l.s4 1983009808
    %v230 = vunpack.c.0.s8 %v229
    %v231 = vlaneseq
    %v232 = vshrl.u32 %v231, 7
    %v233 = vsub.s32 %v230, %v232
    %v234 = vrot.slane %v206, %v233
    %v235 = vcombine.low %v213, %v227
    %v236 = vcombine.high %v213, %v227
    %v237 = vcombine.low %v220, %v234
    %v238 = vcombine.high %v220, %v234
    %v255 = vpack.c.bf16 %v199, %v127
    %v256 = vpack.c.bf16 %v200, %v128
    %v257 = vpack.c.bf16 %v201, %v129
    %v258 = vpack.c.bf16 %v202, %v130
    %v259 = vpack.c.bf16 %v235, %v163
    %v260 = vpack.c.bf16 %v236, %v164
    %v261 = vpack.c.bf16 %v237, %v165
    %v262 = vpack.c.bf16 %v238, %v166
    %v263 = vld [vmem:[#allocation5] sm:$0xf]
    %v264 = vld [vmem:[#allocation5 + $0x4] sm:$0xf]
    %v265 = vld [vmem:[#allocation5 + $0x8] sm:$0xf]
    %v266 = vld [vmem:[#allocation5 + $0xc] sm:$0xf]
    %v267 = vld [vmem:[#allocation5 + $0x10] sm:$0xf]
    %v268 = vld [vmem:[#allocation5 + $0x14] sm:$0xf]
    %v269 = vld [vmem:[#allocation5 + $0x18] sm:$0xf]
    %v270 = vld [vmem:[#allocation5 + $0x1c] sm:$0xf]
    %v271 = vld [vmem:[#allocation5 + $0x20] sm:$0xf]
    %v272 = vld [vmem:[#allocation5 + $0x24] sm:$0xf]
    %v273 = vld [vmem:[#allocation5 + $0x28] sm:$0xf]
    %v274 = vld [vmem:[#allocation5 + $0x2c] sm:$0xf]
    %v275 = vld [vmem:[#allocation5 + $0x30] sm:$0xf]
    %v276 = vld [vmem:[#allocation5 + $0x34] sm:$0xf]
    %v277 = vld [vmem:[#allocation5 + $0x38] sm:$0xf]
    %v278 = vld [vmem:[#allocation5 + $0x3c] sm:$0xf]
    %v279 = vld [vmem:[#allocation5 + $0x40] sm:$0xf]
    %v280 = vld [vmem:[#allocation5 + $0x44] sm:$0xf]
    %v281 = vld [vmem:[#allocation5 + $0x48] sm:$0xf]
    %v282 = vld [vmem:[#allocation5 + $0x4c] sm:$0xf]
    %v283 = vld [vmem:[#allocation5 + $0x50] sm:$0xf]
    %v284 = vld [vmem:[#allocation5 + $0x54] sm:$0xf]
    %v285 = vld [vmem:[#allocation5 + $0x58] sm:$0xf]
    %v286 = vld [vmem:[#allocation5 + $0x5c] sm:$0xf]
    %v287 = vld [vmem:[#allocation5 + $0x60] sm:$0xf]
    %v288 = vld [vmem:[#allocation5 + $0x64] sm:$0xf]
    %v289 = vld [vmem:[#allocation5 + $0x68] sm:$0xf]
    %v290 = vld [vmem:[#allocation5 + $0x6c] sm:$0xf]
    %v291 = vld [vmem:[#allocation5 + $0x70] sm:$0xf]
    %v292 = vld [vmem:[#allocation5 + $0x74] sm:$0xf]
    %v293 = vld [vmem:[#allocation5 + $0x78] sm:$0xf]
    %v294 = vld [vmem:[#allocation5 + $0x7c] sm:$0xf]
    %v295 = vld [vmem:[#allocation5 + $0x80] sm:$0xf]
    %v296 = vld [vmem:[#allocation5 + $0x84] sm:$0xf]
    %v297 = vld [vmem:[#allocation5 + $0x88] sm:$0xf]
    %v298 = vld [vmem:[#allocation5 + $0x8c] sm:$0xf]
    %v299 = vld [vmem:[#allocation5 + $0x90] sm:$0xf]
    %v300 = vld [vmem:[#allocation5 + $0x94] sm:$0xf]
    %v301 = vld [vmem:[#allocation5 + $0x98] sm:$0xf]
    %v302 = vld [vmem:[#allocation5 + $0x9c] sm:$0xf]
    %v303 = vld [vmem:[#allocation5 + $0xa0] sm:$0xf]
    %v304 = vld [vmem:[#allocation5 + $0xa4] sm:$0xf]
    %v305 = vld [vmem:[#allocation5 + $0xa8] sm:$0xf]
    %v306 = vld [vmem:[#allocation5 + $0xac] sm:$0xf]
    %v307 = vld [vmem:[#allocation5 + $0xb0] sm:$0xf]
    %v308 = vld [vmem:[#allocation5 + $0xb4] sm:$0xf]
    %v309 = vld [vmem:[#allocation5 + $0xb8] sm:$0xf]
    %v310 = vld [vmem:[#allocation5 + $0xbc] sm:$0xf]
    %v311 = vld [vmem:[#allocation5 + $0xc0] sm:$0xf]
    %v312 = vld [vmem:[#allocation5 + $0xc4] sm:$0xf]
    %v313 = vld [vmem:[#allocation5 + $0xc8] sm:$0xf]
    %v314 = vld [vmem:[#allocation5 + $0xcc] sm:$0xf]
    %v315 = vld [vmem:[#allocation5 + $0xd0] sm:$0xf]
    %v316 = vld [vmem:[#allocation5 + $0xd4] sm:$0xf]
    %v317 = vld [vmem:[#allocation5 + $0xd8] sm:$0xf]
    %v318 = vld [vmem:[#allocation5 + $0xdc] sm:$0xf]
    %v319 = vld [vmem:[#allocation5 + $0xe0] sm:$0xf]
    %v320 = vld [vmem:[#allocation5 + $0xe4] sm:$0xf]
    %v321 = vld [vmem:[#allocation5 + $0xe8] sm:$0xf]
    %v322 = vld [vmem:[#allocation5 + $0xec] sm:$0xf]
    %v323 = vld [vmem:[#allocation5 + $0xf0] sm:$0xf]
    %v324 = vld [vmem:[#allocation5 + $0xf4] sm:$0xf]
    %v325 = vld [vmem:[#allocation5 + $0xf8] sm:$0xf]
    %v326 = vld [vmem:[#allocation5 + $0xfc] sm:$0xf]
    %v327 = vld [vmem:[#allocation5 + $0x100] sm:$0xf]
    %v328 = vld [vmem:[#allocation5 + $0x104] sm:$0xf]
    %v329 = vld [vmem:[#allocation5 + $0x108] sm:$0xf]
    %v330 = vld [vmem:[#allocation5 + $0x10c] sm:$0xf]
    %v331 = vld [vmem:[#allocation5 + $0x110] sm:$0xf]
    %v332 = vld [vmem:[#allocation5 + $0x114] sm:$0xf]
    %v333 = vld [vmem:[#allocation5 + $0x118] sm:$0xf]
    %v334 = vld [vmem:[#allocation5 + $0x11c] sm:$0xf]
    %v335 = vld [vmem:[#allocation5 + $0x120] sm:$0xf]
    %v336 = vld [vmem:[#allocation5 + $0x124] sm:$0xf]
    %v337 = vld [vmem:[#allocation5 + $0x128] sm:$0xf]
    %v338 = vld [vmem:[#allocation5 + $0x12c] sm:$0xf]
    %v339 = vld [vmem:[#allocation5 + $0x130] sm:$0xf]
    %v340 = vld [vmem:[#allocation5 + $0x134] sm:$0xf]
    %v341 = vld [vmem:[#allocation5 + $0x138] sm:$0xf]
    %v342 = vld [vmem:[#allocation5 + $0x13c] sm:$0xf]
    %v343 = vld [vmem:[#allocation5 + $0x140] sm:$0xf]
    %v344 = vld [vmem:[#allocation5 + $0x144] sm:$0xf]
    %v345 = vld [vmem:[#allocation5 + $0x148] sm:$0xf]
    %v346 = vld [vmem:[#allocation5 + $0x14c] sm:$0xf]
    %v347 = vld [vmem:[#allocation5 + $0x150] sm:$0xf]
    %v348 = vld [vmem:[#allocation5 + $0x154] sm:$0xf]
    %v349 = vld [vmem:[#allocation5 + $0x158] sm:$0xf]
    %v350 = vld [vmem:[#allocation5 + $0x15c] sm:$0xf]
    %v351 = vld [vmem:[#allocation5 + $0x160] sm:$0xf]
    %v352 = vld [vmem:[#allocation5 + $0x164] sm:$0xf]
    %v353 = vld [vmem:[#allocation5 + $0x168] sm:$0xf]
    %v354 = vld [vmem:[#allocation5 + $0x16c] sm:$0xf]
    %v355 = vld [vmem:[#allocation5 + $0x170] sm:$0xf]
    %v356 = vld [vmem:[#allocation5 + $0x174] sm:$0xf]
    %v357 = vld [vmem:[#allocation5 + $0x178] sm:$0xf]
    %v358 = vld [vmem:[#allocation5 + $0x17c] sm:$0xf]
    %v359 = vld [vmem:[#allocation5 + $0x180] sm:$0xf]
    %v360 = vld [vmem:[#allocation5 + $0x184] sm:$0xf]
    %v361 = vld [vmem:[#allocation5 + $0x188] sm:$0xf]
    %v362 = vld [vmem:[#allocation5 + $0x18c] sm:$0xf]
    %v363 = vld [vmem:[#allocation5 + $0x190] sm:$0xf]
    %v364 = vld [vmem:[#allocation5 + $0x194] sm:$0xf]
    %v365 = vld [vmem:[#allocation5 + $0x198] sm:$0xf]
    %v366 = vld [vmem:[#allocation5 + $0x19c] sm:$0xf]
    %v367 = vld [vmem:[#allocation5 + $0x1a0] sm:$0xf]
    %v368 = vld [vmem:[#allocation5 + $0x1a4] sm:$0xf]
    %v369 = vld [vmem:[#allocation5 + $0x1a8] sm:$0xf]
    %v370 = vld [vmem:[#allocation5 + $0x1ac] sm:$0xf]
    %v371 = vld [vmem:[#allocation5 + $0x1b0] sm:$0xf]
    %v372 = vld [vmem:[#allocation5 + $0x1b4] sm:$0xf]
    %v373 = vld [vmem:[#allocation5 + $0x1b8] sm:$0xf]
    %v374 = vld [vmem:[#allocation5 + $0x1bc] sm:$0xf]
    %v375 = vld [vmem:[#allocation5 + $0x1c0] sm:$0xf]
    %v376 = vld [vmem:[#allocation5 + $0x1c4] sm:$0xf]
    %v377 = vld [vmem:[#allocation5 + $0x1c8] sm:$0xf]
    %v378 = vld [vmem:[#allocation5 + $0x1cc] sm:$0xf]
    %v379 = vld [vmem:[#allocation5 + $0x1d0] sm:$0xf]
    %v380 = vld [vmem:[#allocation5 + $0x1d4] sm:$0xf]
    %v381 = vld [vmem:[#allocation5 + $0x1d8] sm:$0xf]
    %v382 = vld [vmem:[#allocation5 + $0x1dc] sm:$0xf]
    %v383 = vld [vmem:[#allocation5 + $0x1e0] sm:$0xf]
    %v384 = vld [vmem:[#allocation5 + $0x1e4] sm:$0xf]
    %v385 = vld [vmem:[#allocation5 + $0x1e8] sm:$0xf]
    %v386 = vld [vmem:[#allocation5 + $0x1ec] sm:$0xf]
    %v387 = vld [vmem:[#allocation5 + $0x1f0] sm:$0xf]
    %v388 = vld [vmem:[#allocation5 + $0x1f4] sm:$0xf]
    %v389 = vld [vmem:[#allocation5 + $0x1f8] sm:$0xf]
    %v390 = vld [vmem:[#allocation5 + $0x1fc] sm:$0xf]
    %v391 = vld [vmem:[%s2] sm:$0x1]
    %v393 = vlaneseq
    %v394 = vshrl.u32 %v393, 7
    %v395 = vsub.s32 0, %v394
    %v396 = vrot.slane %v391, %v395
    %v526 = vunpack.c.l.b16 %v263
    %v527 = vunpack.c.l.b16 %v264
    %v528 = vunpack.c.l.b16 %v265
    %v529 = vunpack.c.l.b16 %v266
    %v530 = vunpack.c.l.b16 %v267
    %v531 = vunpack.c.l.b16 %v268
    %v532 = vunpack.c.l.b16 %v269
    %v533 = vunpack.c.l.b16 %v270
    %v534 = vunpack.c.l.b16 %v271
    %v535 = vunpack.c.l.b16 %v272
    %v536 = vunpack.c.l.b16 %v273
    %v537 = vunpack.c.l.b16 %v274
    %v538 = vunpack.c.l.b16 %v275
    %v539 = vunpack.c.l.b16 %v276
    %v540 = vunpack.c.l.b16 %v277
    %v541 = vunpack.c.l.b16 %v278
    %v542 = vunpack.c.l.b16 %v279
    %v543 = vunpack.c.l.b16 %v280
    %v544 = vunpack.c.l.b16 %v281
    %v545 = vunpack.c.l.b16 %v282
    %v546 = vunpack.c.l.b16 %v283
    %v547 = vunpack.c.l.b16 %v284
    %v548 = vunpack.c.l.b16 %v285
    %v549 = vunpack.c.l.b16 %v286
    %v550 = vunpack.c.l.b16 %v287
    %v551 = vunpack.c.l.b16 %v288
    %v552 = vunpack.c.l.b16 %v289
    %v553 = vunpack.c.l.b16 %v290
    %v554 = vunpack.c.l.b16 %v291
    %v555 = vunpack.c.l.b16 %v292
    %v556 = vunpack.c.l.b16 %v293
    %v557 = vunpack.c.l.b16 %v294
    %v558 = vunpack.c.l.b16 %v295
    %v559 = vunpack.c.l.b16 %v296
    %v560 = vunpack.c.l.b16 %v297
    %v561 = vunpack.c.l.b16 %v298
    %v562 = vunpack.c.l.b16 %v299
    %v563 = vunpack.c.l.b16 %v300
    %v564 = vunpack.c.l.b16 %v301
    %v565 = vunpack.c.l.b16 %v302
    %v566 = vunpack.c.l.b16 %v303
    %v567 = vunpack.c.l.b16 %v304
    %v568 = vunpack.c.l.b16 %v305
    %v569 = vunpack.c.l.b16 %v306
    %v570 = vunpack.c.l.b16 %v307
    %v571 = vunpack.c.l.b16 %v308
    %v572 = vunpack.c.l.b16 %v309
    %v573 = vunpack.c.l.b16 %v310
    %v574 = vunpack.c.l.b16 %v311
    %v575 = vunpack.c.l.b16 %v312
    %v576 = vunpack.c.l.b16 %v313
    %v577 = vunpack.c.l.b16 %v314
    %v578 = vunpack.c.l.b16 %v315
    %v579 = vunpack.c.l.b16 %v316
    %v580 = vunpack.c.l.b16 %v317
    %v581 = vunpack.c.l.b16 %v318
    %v582 = vunpack.c.l.b16 %v319
    %v583 = vunpack.c.l.b16 %v320
    %v584 = vunpack.c.l.b16 %v321
    %v585 = vunpack.c.l.b16 %v322
    %v586 = vunpack.c.l.b16 %v323
    %v587 = vunpack.c.l.b16 %v324
    %v588 = vunpack.c.l.b16 %v325
    %v589 = vunpack.c.l.b16 %v326
    %v590 = vunpack.c.l.b16 %v327
    %v591 = vunpack.c.l.b16 %v328
    %v592 = vunpack.c.l.b16 %v329
    %v593 = vunpack.c.l.b16 %v330
    %v594 = vunpack.c.l.b16 %v331
    %v595 = vunpack.c.l.b16 %v332
    %v596 = vunpack.c.l.b16 %v333
    %v597 = vunpack.c.l.b16 %v334
    %v598 = vunpack.c.l.b16 %v335
    %v599 = vunpack.c.l.b16 %v336
    %v600 = vunpack.c.l.b16 %v337
    %v601 = vunpack.c.l.b16 %v338
    %v602 = vunpack.c.l.b16 %v339
    %v603 = vunpack.c.l.b16 %v340
    %v604 = vunpack.c.l.b16 %v341
    %v605 = vunpack.c.l.b16 %v342
    %v606 = vunpack.c.l.b16 %v343
    %v607 = vunpack.c.l.b16 %v344
    %v608 = vunpack.c.l.b16 %v345
    %v609 = vunpack.c.l.b16 %v346
    %v610 = vunpack.c.l.b16 %v347
    %v611 = vunpack.c.l.b16 %v348
    %v612 = vunpack.c.l.b16 %v349
    %v613 = vunpack.c.l.b16 %v350
    %v614 = vunpack.c.l.b16 %v351
    %v615 = vunpack.c.l.b16 %v352
    %v616 = vunpack.c.l.b16 %v353
    %v617 = vunpack.c.l.b16 %v354
    %v618 = vunpack.c.l.b16 %v355
    %v619 = vunpack.c.l.b16 %v356
    %v620 = vunpack.c.l.b16 %v357
    %v621 = vunpack.c.l.b16 %v358
    %v622 = vunpack.c.l.b16 %v359
    %v623 = vunpack.c.l.b16 %v360
    %v624 = vunpack.c.l.b16 %v361
    %v625 = vunpack.c.l.b16 %v362
    %v626 = vunpack.c.l.b16 %v363
    %v627 = vunpack.c.l.b16 %v364
    %v628 = vunpack.c.l.b16 %v365
    %v629 = vunpack.c.l.b16 %v366
    %v630 = vunpack.c.l.b16 %v367
    %v631 = vunpack.c.l.b16 %v368
    %v632 = vunpack.c.l.b16 %v369
    %v633 = vunpack.c.l.b16 %v370
    %v634 = vunpack.c.l.b16 %v371
    %v635 = vunpack.c.l.b16 %v372
    %v636 = vunpack.c.l.b16 %v373
    %v637 = vunpack.c.l.b16 %v374
    %v638 = vunpack.c.l.b16 %v375
    %v639 = vunpack.c.l.b16 %v376
    %v640 = vunpack.c.l.b16 %v377
    %v641 = vunpack.c.l.b16 %v378
    %v642 = vunpack.c.l.b16 %v379
    %v643 = vunpack.c.l.b16 %v380
    %v644 = vunpack.c.l.b16 %v381
    %v645 = vunpack.c.l.b16 %v382
    %v646 = vunpack.c.l.b16 %v383
    %v647 = vunpack.c.l.b16 %v384
    %v648 = vunpack.c.l.b16 %v385
    %v649 = vunpack.c.l.b16 %v386
    %v650 = vunpack.c.l.b16 %v387
    %v651 = vunpack.c.l.b16 %v388
    %v652 = vunpack.c.l.b16 %v389
    %v653 = vunpack.c.l.b16 %v390
    %v654 = vpack.c.b16 %v527, %v526
    %v655 = vpack.c.b16 %v529, %v528
    %v656 = vpack.c.b16 %v531, %v530
    %v657 = vpack.c.b16 %v533, %v532
    %v658 = vpack.c.b16 %v535, %v534
    %v659 = vpack.c.b16 %v537, %v536
    %v660 = vpack.c.b16 %v539, %v538
    %v661 = vpack.c.b16 %v541, %v540
    %v662 = vpack.c.b16 %v543, %v542
    %v663 = vpack.c.b16 %v545, %v544
    %v664 = vpack.c.b16 %v547, %v546
    %v665 = vpack.c.b16 %v549, %v548
    %v666 = vpack.c.b16 %v551, %v550
    %v667 = vpack.c.b16 %v553, %v552
    %v668 = vpack.c.b16 %v555, %v554
    %v669 = vpack.c.b16 %v557, %v556
    %v670 = vpack.c.b16 %v559, %v558
    %v671 = vpack.c.b16 %v561, %v560
    %v672 = vpack.c.b16 %v563, %v562
    %v673 = vpack.c.b16 %v565, %v564
    %v674 = vpack.c.b16 %v567, %v566
    %v675 = vpack.c.b16 %v569, %v568
    %v676 = vpack.c.b16 %v571, %v570
    %v677 = vpack.c.b16 %v573, %v572
    %v678 = vpack.c.b16 %v575, %v574
    %v679 = vpack.c.b16 %v577, %v576
    %v680 = vpack.c.b16 %v579, %v578
    %v681 = vpack.c.b16 %v581, %v580
    %v682 = vpack.c.b16 %v583, %v582
    %v683 = vpack.c.b16 %v585, %v584
    %v684 = vpack.c.b16 %v587, %v586
    %v685 = vpack.c.b16 %v589, %v588
    %v686 = vpack.c.b16 %v591, %v590
    %v687 = vpack.c.b16 %v593, %v592
    %v688 = vpack.c.b16 %v595, %v594
    %v689 = vpack.c.b16 %v597, %v596
    %v690 = vpack.c.b16 %v599, %v598
    %v691 = vpack.c.b16 %v601, %v600
    %v692 = vpack.c.b16 %v603, %v602
    %v693 = vpack.c.b16 %v605, %v604
    %v694 = vpack.c.b16 %v607, %v606
    %v695 = vpack.c.b16 %v609, %v608
    %v696 = vpack.c.b16 %v611, %v610
    %v697 = vpack.c.b16 %v613, %v612
    %v698 = vpack.c.b16 %v615, %v614
    %v699 = vpack.c.b16 %v617, %v616
    %v700 = vpack.c.b16 %v619, %v618
    %v701 = vpack.c.b16 %v621, %v620
    %v702 = vpack.c.b16 %v623, %v622
    %v703 = vpack.c.b16 %v625, %v624
    %v704 = vpack.c.b16 %v627, %v626
    %v705 = vpack.c.b16 %v629, %v628
    %v706 = vpack.c.b16 %v631, %v630
    %v707 = vpack.c.b16 %v633, %v632
    %v708 = vpack.c.b16 %v635, %v634
    %v709 = vpack.c.b16 %v637, %v636
    %v710 = vpack.c.b16 %v639, %v638
    %v711 = vpack.c.b16 %v641, %v640
    %v712 = vpack.c.b16 %v643, %v642
    %v713 = vpack.c.b16 %v645, %v644
    %v714 = vpack.c.b16 %v647, %v646
    %v715 = vpack.c.b16 %v649, %v648
    %v716 = vpack.c.b16 %v651, %v650
    %v717 = vpack.c.b16 %v653, %v652
    %782 = vmatprep.subr.bf16.mxu0 0
    %783 = vmatpush1.bf16.msra.mxu0 %v654
    %784 = vmatprep.subr.bf16.mxu0 0
    %785 = vmatpush1.bf16.msra.mxu0 %v655
    %786 = vmatprep.subr.bf16.mxu0 0
    %787 = vmatpush1.bf16.msra.mxu0 %v656
    %788 = vmatprep.subr.bf16.mxu0 0
    %789 = vmatpush1.bf16.msra.mxu0 %v657
    %790 = vmatprep.subr.bf16.mxu0 0
    %791 = vmatpush1.bf16.msra.mxu0 %v658
    %792 = vmatprep.subr.bf16.mxu0 0
    %793 = vmatpush1.bf16.msra.mxu0 %v659
    %794 = vmatprep.subr.bf16.mxu0 0
    %795 = vmatpush1.bf16.msra.mxu0 %v660
    %796 = vmatprep.subr.bf16.mxu0 0
    %797 = vmatpush1.bf16.msra.mxu0 %v661
    %798 = vmatprep.subr.bf16.mxu0 0
    %799 = vmatpush1.bf16.msra.mxu0 %v662
    %800 = vmatprep.subr.bf16.mxu0 0
    %801 = vmatpush1.bf16.msra.mxu0 %v663
    %802 = vmatprep.subr.bf16.mxu0 0
    %803 = vmatpush1.bf16.msra.mxu0 %v664
    %804 = vmatprep.subr.bf16.mxu0 0
    %805 = vmatpush1.bf16.msra.mxu0 %v665
    %806 = vmatprep.subr.bf16.mxu0 0
    %807 = vmatpush1.bf16.msra.mxu0 %v666
    %808 = vmatprep.subr.bf16.mxu0 0
    %809 = vmatpush1.bf16.msra.mxu0 %v667
    %810 = vmatprep.subr.bf16.mxu0 0
    %811 = vmatpush1.bf16.msra.mxu0 %v668
    %812 = vmatprep.subr.bf16.mxu0 0
    %813 = vmatpush1.bf16.msra.mxu0 %v669
    %814 = vmatprep.mubr.bf16.mxu0 %v256
    %815 = vmatmul.mubr.bf16.gmra.mrb[0].mxu0 %v255
    %v816 = vpop.f32.mrb[0].mxu0
    %v817 = vadd.f32 %v396, %v816
    %v818 = vpop.f32.mrb[0].mxu0
    %v819 = vpop.f32.mrb[0].mxu0
    %v820 = vadd.f32 %v396, %v819
    %v821 = vpop.f32.mrb[0].mxu0
    %822 = vdwg.mxu0
    %823 = vmatprep.subr.bf16.mxu0 0
    %824 = vmatpush1.bf16.msra.mxu0 %v670
    %825 = vmatprep.subr.bf16.mxu0 0
    %826 = vmatpush1.bf16.msra.mxu0 %v671
    %827 = vmatprep.subr.bf16.mxu0 0
    %828 = vmatpush1.bf16.msra.mxu0 %v672
    %829 = vmatprep.subr.bf16.mxu0 0
    %830 = vmatpush1.bf16.msra.mxu0 %v673
    %831 = vmatprep.subr.bf16.mxu0 0
    %832 = vmatpush1.bf16.msra.mxu0 %v674
    %833 = vmatprep.subr.bf16.mxu0 0
    %834 = vmatpush1.bf16.msra.mxu0 %v675
    %835 = vmatprep.subr.bf16.mxu0 0
    %836 = vmatpush1.bf16.msra.mxu0 %v676
    %837 = vmatprep.subr.bf16.mxu0 0
    %838 = vmatpush1.bf16.msra.mxu0 %v677
    %839 = vmatprep.subr.bf16.mxu0 0
    %840 = vmatpush1.bf16.msra.mxu0 %v678
    %841 = vmatprep.subr.bf16.mxu0 0
    %842 = vmatpush1.bf16.msra.mxu0 %v679
    %843 = vmatprep.subr.bf16.mxu0 0
    %844 = vmatpush1.bf16.msra.mxu0 %v680
    %845 = vmatprep.subr.bf16.mxu0 0
    %846 = vmatpush1.bf16.msra.mxu0 %v681
    %847 = vmatprep.subr.bf16.mxu0 0
    %848 = vmatpush1.bf16.msra.mxu0 %v682
    %849 = vmatprep.subr.bf16.mxu0 0
    %850 = vmatpush1.bf16.msra.mxu0 %v683
    %851 = vmatprep.subr.bf16.mxu0 0
    %852 = vmatpush1.bf16.msra.mxu0 %v684
    %853 = vmatprep.subr.bf16.mxu0 0
    %854 = vmatpush1.bf16.msra.mxu0 %v685
    %855 = vmatprep.mubr.bf16.mxu0 %v258
    %856 = vmatmul.mubr.bf16.gmra.mrb[0].mxu0 %v257
    %v857 = vpop.f32.mrb[0].mxu0
    %v858 = vadd.f32 %v817, %v857
    %v859 = vpop.f32.mrb[0].mxu0
    %v860 = vpop.f32.mrb[0].mxu0
    %v861 = vadd.f32 %v820, %v860
    %v862 = vpop.f32.mrb[0].mxu0
    %863 = vdwg.mxu0
    %864 = vmatprep.subr.bf16.mxu0 0
    %865 = vmatpush1.bf16.msra.mxu0 %v686
    %866 = vmatprep.subr.bf16.mxu0 0
    %867 = vmatpush1.bf16.msra.mxu0 %v687
    %868 = vmatprep.subr.bf16.mxu0 0
    %869 = vmatpush1.bf16.msra.mxu0 %v688
    %870 = vmatprep.subr.bf16.mxu0 0
    %871 = vmatpush1.bf16.msra.mxu0 %v689
    %872 = vmatprep.subr.bf16.mxu0 0
    %873 = vmatpush1.bf16.msra.mxu0 %v690
    %874 = vmatprep.subr.bf16.mxu0 0
    %875 = vmatpush1.bf16.msra.mxu0 %v691
    %876 = vmatprep.subr.bf16.mxu0 0
    %877 = vmatpush1.bf16.msra.mxu0 %v692
    %878 = vmatprep.subr.bf16.mxu0 0
    %879 = vmatpush1.bf16.msra.mxu0 %v693
    %880 = vmatprep.subr.bf16.mxu0 0
    %881 = vmatpush1.bf16.msra.mxu0 %v694
    %882 = vmatprep.subr.bf16.mxu0 0
    %883 = vmatpush1.bf16.msra.mxu0 %v695
    %884 = vmatprep.subr.bf16.mxu0 0
    %885 = vmatpush1.bf16.msra.mxu0 %v696
    %886 = vmatprep.subr.bf16.mxu0 0
    %887 = vmatpush1.bf16.msra.mxu0 %v697
    %888 = vmatprep.subr.bf16.mxu0 0
    %889 = vmatpush1.bf16.msra.mxu0 %v698
    %890 = vmatprep.subr.bf16.mxu0 0
    %891 = vmatpush1.bf16.msra.mxu0 %v699
    %892 = vmatprep.subr.bf16.mxu0 0
    %893 = vmatpush1.bf16.msra.mxu0 %v700
    %894 = vmatprep.subr.bf16.mxu0 0
    %895 = vmatpush1.bf16.msra.mxu0 %v701
    %896 = vmatprep.mubr.bf16.mxu0 %v260
    %897 = vmatmul.mubr.bf16.gmra.mrb[0].mxu0 %v259
    %v898 = vpop.f32.mrb[0].mxu0
    %v899 = vadd.f32 %v858, %v898
    %v900 = vpop.f32.mrb[0].mxu0
    %v901 = vpop.f32.mrb[0].mxu0
    %v902 = vadd.f32 %v861, %v901
    %v903 = vpop.f32.mrb[0].mxu0
    %904 = vdwg.mxu0
    %905 = vmatprep.subr.bf16.mxu0 0
    %906 = vmatpush1.bf16.msra.mxu0 %v702
    %907 = vmatprep.subr.bf16.mxu0 0
    %908 = vmatpush1.bf16.msra.mxu0 %v703
    %909 = vmatprep.subr.bf16.mxu0 0
    %910 = vmatpush1.bf16.msra.mxu0 %v704
    %911 = vmatprep.subr.bf16.mxu0 0
    %912 = vmatpush1.bf16.msra.mxu0 %v705
    %913 = vmatprep.subr.bf16.mxu0 0
    %914 = vmatpush1.bf16.msra.mxu0 %v706
    %915 = vmatprep.subr.bf16.mxu0 0
    %916 = vmatpush1.bf16.msra.mxu0 %v707
    %917 = vmatprep.subr.bf16.mxu0 0
    %918 = vmatpush1.bf16.msra.mxu0 %v708
    %919 = vmatprep.subr.bf16.mxu0 0
    %920 = vmatpush1.bf16.msra.mxu0 %v709
    %921 = vmatprep.subr.bf16.mxu0 0
    %922 = vmatpush1.bf16.msra.mxu0 %v710
    %923 = vmatprep.subr.bf16.mxu0 0
    %924 = vmatpush1.bf16.msra.mxu0 %v711
    %925 = vmatprep.subr.bf16.mxu0 0
    %926 = vmatpush1.bf16.msra.mxu0 %v712
    %927 = vmatprep.subr.bf16.mxu0 0
    %928 = vmatpush1.bf16.msra.mxu0 %v713
    %929 = vmatprep.subr.bf16.mxu0 0
    %930 = vmatpush1.bf16.msra.mxu0 %v714
    %931 = vmatprep.subr.bf16.mxu0 0
    %932 = vmatpush1.bf16.msra.mxu0 %v715
    %933 = vmatprep.subr.bf16.mxu0 0
    %934 = vmatpush1.bf16.msra.mxu0 %v716
    %935 = vmatprep.subr.bf16.mxu0 0
    %936 = vmatpush1.bf16.msra.mxu0 %v717
    %937 = vmatprep.mubr.bf16.mxu0 %v262
    %938 = vmatmul.mubr.bf16.gmra.mrb[0].mxu0 %v261
    %v939 = vpop.f32.mrb[0].mxu0
    %v940 = vadd.f32 %v899, %v939
    %v941 = vpop.f32.mrb[0].mxu0
    %v942 = vpop.f32.mrb[0].mxu0
    %v943 = vadd.f32 %v902, %v942
    %v944 = vpop.f32.mrb[0].mxu0
    %945 = vdwg.mxu0
    %v946 = vmax.f32 %v940, 0.0
    %v947 = vmax.f32 %v943, 0.0
    %v948 = vpack.c.bf16 %v947, %v946
    %v949 = vld [vmem:[#allocation7] sm:$0xf]
    %v950 = vld [vmem:[#allocation7 + $0x4] sm:$0xf]
    %v951 = vld [vmem:[#allocation7 + $0x8] sm:$0xf]
    %v952 = vld [vmem:[#allocation7 + $0xc] sm:$0xf]
    %v953 = vld [vmem:[#allocation7 + $0x10] sm:$0xf]
    %v954 = vld [vmem:[#allocation7 + $0x14] sm:$0xf]
    %v955 = vld [vmem:[#allocation7 + $0x18] sm:$0xf]
    %v956 = vld [vmem:[#allocation7 + $0x1c] sm:$0xf]
    %v957 = vld [vmem:[#allocation7 + $0x20] sm:$0xf]
    %v958 = vld [vmem:[#allocation7 + $0x24] sm:$0xf]
    %v959 = vld [vmem:[#allocation7 + $0x28] sm:$0xf]
    %v960 = vld [vmem:[#allocation7 + $0x2c] sm:$0xf]
    %v961 = vld [vmem:[#allocation7 + $0x30] sm:$0xf]
    %v962 = vld [vmem:[#allocation7 + $0x34] sm:$0xf]
    %v963 = vld [vmem:[#allocation7 + $0x38] sm:$0xf]
    %v964 = vld [vmem:[#allocation7 + $0x3c] sm:$0xf]
    %v965 = vld [vmem:[%s4] sm:$0x1]
    %v967 = vlaneseq
    %v968 = vshrl.u32 %v967, 7
    %v969 = vsub.s32 0, %v968
    %v970 = vrot.slane %v965, %v969
    %v988 = vunpack.c.l.b16 %v949
    %v989 = vunpack.c.l.b16 %v950
    %v990 = vunpack.c.l.b16 %v951
    %v991 = vunpack.c.l.b16 %v952
    %v992 = vunpack.c.l.b16 %v953
    %v993 = vunpack.c.l.b16 %v954
    %v994 = vunpack.c.l.b16 %v955
    %v995 = vunpack.c.l.b16 %v956
    %v996 = vunpack.c.l.b16 %v957
    %v997 = vunpack.c.l.b16 %v958
    %v998 = vunpack.c.l.b16 %v959
    %v999 = vunpack.c.l.b16 %v960
    %v1000 = vunpack.c.l.b16 %v961
    %v1001 = vunpack.c.l.b16 %v962
    %v1002 = vunpack.c.l.b16 %v963
    %v1003 = vunpack.c.l.b16 %v964
    %v1004 = vpack.c.b16 %v989, %v988
    %v1005 = vpack.c.b16 %v991, %v990
    %v1006 = vpack.c.b16 %v993, %v992
    %v1007 = vpack.c.b16 %v995, %v994
    %v1008 = vpack.c.b16 %v997, %v996
    %v1009 = vpack.c.b16 %v999, %v998
    %v1010 = vpack.c.b16 %v1001, %v1000
    %v1011 = vpack.c.b16 %v1003, %v1002
    %1020 = vmatprep.subr.bf16.mxu0 0
    %1021 = vmatpush1.bf16.msra.mxu0 %v1004
    %1022 = vmatprep.subr.bf16.mxu0 0
    %1023 = vmatpush1.bf16.msra.mxu0 %v1005
    %1024 = vmatprep.subr.bf16.mxu0 0
    %1025 = vmatpush1.bf16.msra.mxu0 %v1006
    %1026 = vmatprep.subr.bf16.mxu0 0
    %1027 = vmatpush1.bf16.msra.mxu0 %v1007
    %1028 = vmatprep.subr.bf16.mxu0 0
    %1029 = vmatpush1.bf16.msra.mxu0 %v1008
    %1030 = vmatprep.subr.bf16.mxu0 0
    %1031 = vmatpush1.bf16.msra.mxu0 %v1009
    %1032 = vmatprep.subr.bf16.mxu0 0
    %1033 = vmatpush1.bf16.msra.mxu0 %v1010
    %1034 = vmatprep.subr.bf16.mxu0 0
    %1035 = vmatpush1.bf16.msra.mxu0 %v1011
    %1036 = vmatprep.subr.bf16.mxu0 0
    %1037 = vmatpush1.bf16.msra.mxu0 0
    %1038 = vmatprep.subr.bf16.mxu0 0
    %1039 = vmatpush1.bf16.msra.mxu0 0
    %1040 = vmatprep.subr.bf16.mxu0 0
    %1041 = vmatpush1.bf16.msra.mxu0 0
    %1042 = vmatprep.subr.bf16.mxu0 0
    %1043 = vmatpush1.bf16.msra.mxu0 0
    %1044 = vmatprep.subr.bf16.mxu0 0
    %1045 = vmatpush1.bf16.msra.mxu0 0
    %1046 = vmatprep.subr.bf16.mxu0 0
    %1047 = vmatpush1.bf16.msra.mxu0 0
    %1048 = vmatprep.subr.bf16.mxu0 0
    %1049 = vmatpush1.bf16.msra.mxu0 0
    %1050 = vmatprep.subr.bf16.mxu0 0
    %1051 = vmatpush1.bf16.msra.mxu0 0
    %1052 = vmatprep.mubr.bf16.mxu0 0
    %1053 = vmatmul.mubr.bf16.gmra.mrb[0].mxu0 %v948
    %v1054 = vpop.f32.mrb[0].mxu0
    %v1055 = vadd.f32 %v970, %v1054
    %v1056 = vpop.f32.mrb[0].mxu0
    %v1057 = vpop.f32.mrb[0].mxu0
    %v1058 = vadd.f32 %v970, %v1057
    %v1059 = vpop.f32.mrb[0].mxu0
    %1060 = vdwg.mxu0
    %v1061 = vpack.c.bf16 %v1058, %v1055
    %v1063 = vcombine.high %v1061, %v1061
    %v1065 = vunpack.c.l.s4 1966171168
    %v1066 = vunpack.c.0.s8 %v1065
    %v1067 = vlaneseq
    %v1068 = vshrl.u32 %v1067, 7
    %v1069 = vsub.s32 %v1066, %v1068
    %v1070 = vrot.slane %v1061, %v1069
    %v1072 = vunpack.c.l.s4 1966171168
    %v1073 = vunpack.c.0.s8 %v1072
    %v1074 = vlaneseq
    %v1075 = vshrl.u32 %v1074, 7
    %v1076 = vsub.s32 %v1073, %v1075
    %v1077 = vrot.slane %v1063, %v1076
    %v1078 = vcombine.high %v1070, %v1070
    %v1079 = vcombine.high %v1077, %v1077
    %v1081 = vunpack.c.l.s4 1966171168
    %v1082 = vunpack.c.0.s8 %v1081
    %v1083 = vlaneseq
    %v1084 = vshrl.u32 %v1083, 7
    %v1085 = vsub.s32 %v1082, %v1084
    %v1086 = vrot.slane %v1070, %v1085
    %v1088 = vunpack.c.l.s4 1966171168
    %v1089 = vunpack.c.0.s8 %v1088
    %v1090 = vlaneseq
    %v1091 = vshrl.u32 %v1090, 7
    %v1092 = vsub.s32 %v1089, %v1091
    %v1093 = vrot.slane %v1077, %v1092
    %v1095 = vunpack.c.l.s4 1966171168
    %v1096 = vunpack.c.0.s8 %v1095
    %v1097 = vlaneseq
    %v1098 = vshrl.u32 %v1097, 7
    %v1099 = vsub.s32 %v1096, %v1098
    %v1100 = vrot.slane %v1078, %v1099
    %v1102 = vunpack.c.l.s4 1966171168
    %v1103 = vunpack.c.0.s8 %v1102
    %v1104 = vlaneseq
    %v1105 = vshrl.u32 %v1104, 7
    %v1106 = vsub.s32 %v1103, %v1105
    %v1107 = vrot.slane %v1079, %v1106
    %v1108 = vcombine.high %v1086, %v1086
    %v1109 = vcombine.high %v1093, %v1093
    %v1110 = vcombine.high %v1100, %v1100
    %v1111 = vcombine.high %v1107, %v1107
    %1120 = vst [vmem:[#allocation8] sm:$0x1] %v1086
    %1121 = vst [vmem:[#allocation8 + $0x1] sm:$0x1] %v1100
    %1122 = vst [vmem:[#allocation8 + $0x2] sm:$0x1] %v1108
    %1123 = vst [vmem:[#allocation8 + $0x3] sm:$0x1] %v1110
    %1124 = vst [vmem:[#allocation8 + $0x4] sm:$0x1] %v1093
    %1125 = vst [vmem:[#allocation8 + $0x5] sm:$0x1] %v1107
    %1126 = vst [vmem:[#allocation8 + $0x6] sm:$0x1] %v1109
    %1127 = vst [vmem:[#allocation8 + $0x7] sm:$0x1] %v1111
    // Predicated region
    $region34: #{tpu_custom_call.1} parent=1 // pred_check
      _
    $region35: #{tpu_custom_call.1} parent=1 // pred_check_branch
      %1129 = sbr.rel (0) target = $region37
    $region36: #{tpu_custom_call.1} parent=1 // pred_region
      %s1131 = ssub.s32 128, 16
      %1132 = vsyncadd [#allocation4], %s1131
      %s1133 = sshll.u32 [#allocation8], 4
      %s1134 = int_to_ptr.vmem [resolvable:$true] %s1133
      %1139 = dma.vmem_to_hbm [thread:$0]  %s1134, 16, %s5, [#allocation4], 16, 16, 1
    $region37: #{tpu_custom_call.1} parent=1 // pred_fallthru
      _
    // Predicated region
    $region38: #{tpu_custom_call.1} parent=1 // pred_check
      _
    $region39: #{tpu_custom_call.1} parent=1 // pred_check_branch
      %1141 = sbr.rel (0) target = $region41
    $region40: #{tpu_custom_call.1} parent=1 // pred_region
      %1142 = dma.done [#allocation4], 128
    $region41: #{tpu_custom_call.1} parent=1 // pred_fallthru
      _
    %1143 = vsyncpa [#allocation3], 1
    %1144 = vsyncpa [#allocation6], 1
    %1145 = vsyncpa [#allocation4], 1

</llo_original>
